<compile_context>
chip_gen: v6e
topology: v6e:2x2x1
jax: 0.10.0
libtpu: 0.0.40
codegen_flags: <defaults>
</compile_context>

<pallas_src>
import functools

import jax
import jax.numpy as jnp
from jax.experimental import pallas as pl
from jax.experimental.pallas import tpu as pltpu


def _miou_kernel(x_ref, t_ref, out_ref, acc_ref, *, hw_total, needs_mask):
    # x_ref: (1, C, THW) logits (native dtype); t_ref: (1, 1, THW) int32 labels
    # out_ref: (1, 2, C) f32 [inter; union]; acc_ref: (2, C) f32 scratch accum.
    k = pl.program_id(1)
    nk = pl.num_programs(1)

    @pl.when(k == 0)
    def _():
        acc_ref[...] = jnp.zeros_like(acc_ref)

    x = x_ref[0].astype(jnp.float32)           # (C, THW)
    labels = t_ref[0]                          # (1, THW) int32
    C, THW = x.shape

    # softmax over the class (sublane) axis
    m = jnp.max(x, axis=0, keepdims=True)
    e = jnp.exp(x - m)
    denom = jnp.sum(e, axis=0, keepdims=True)              # (1, THW)
    sm = e * pl.reciprocal(denom, approx=False)            # (C, THW)

    cls_ids = jax.lax.broadcasted_iota(jnp.int32, (C, THW), 0)
    hit = cls_ids == labels                                # bool one-hot (C, THW)

    if needs_mask:
        # mask out the padded tail lanes of the last HW tile
        col = jax.lax.broadcasted_iota(jnp.int32, (1, THW), 1) + k * THW
        valid = col < hw_total                             # (1, THW)
        hit = jnp.logical_and(hit, valid)
        sm_sum_src = jnp.where(valid, sm, 0.0)
    else:
        sm_sum_src = sm

    inter_p = jnp.sum(jnp.where(hit, sm, 0.0), axis=1)     # (C,)
    cnt_p = jnp.sum(hit.astype(jnp.float32), axis=1)       # (C,)  sum of onehot
    sumsm_p = jnp.sum(sm_sum_src, axis=1)                  # (C,)  sum of softmax
    union_p = sumsm_p + cnt_p - inter_p                    # (C,)

    acc_ref[0:1, :] += inter_p.reshape(1, C)
    acc_ref[1:2, :] += union_p.reshape(1, C)

    @pl.when(k == nk - 1)
    def _():
        out_ref[...] = acc_ref[...].reshape(1, 2, C)


def _round_up(a, b):
    return (a + b - 1) // b * b


def miou_inter_union(inputs_nchw, target_nhw, n_classes, *, thw_target=8192):
    """Runs the Pallas kernel; returns (inter, union), each of shape (N, C)."""
    N, C, H, W = inputs_nchw.shape
    assert C == n_classes
    HW = H * W

    # keep logits in their native dtype (no wrapper-side f32 upcast)
    x = inputs_nchw.reshape(N, C, HW)
    t = target_nhw.reshape(N, 1, HW).astype(jnp.int32)

    # lane-tile size: multiple of 128, capped by an f32 working-set budget
    # (~6 live (C, THW) temporaries under ~8 MiB -> fits default scoped VMEM
    #  on v5e (16 MiB), v6e (32 MiB) and v7x (32 MiB scoped / 64 MiB phys)).
    hw128 = _round_up(HW, 128)
    budget_lanes = max(128, (8 * 1024 * 1024) // (C * 4 * 6) // 128 * 128)
    thw = min(hw128, _round_up(thw_target, 128), budget_lanes)
    hw_pad = _round_up(HW, thw)
    k_tiles = hw_pad // thw
    needs_mask = hw_pad != HW

    if needs_mask:
        pad = hw_pad - HW
        x = jnp.pad(x, ((0, 0), (0, 0), (0, pad)))
        t = jnp.pad(t, ((0, 0), (0, 0), (0, pad)))

    kernel = functools.partial(_miou_kernel, hw_total=HW, needs_mask=needs_mask)

    out = pl.pallas_call(
        kernel,
        out_shape=jax.ShapeDtypeStruct((N, 2, C), jnp.float32),
        grid_spec=pltpu.PrefetchScalarGridSpec(
            num_scalar_prefetch=0,
            grid=(N, k_tiles),
            in_specs=[
                pl.BlockSpec((1, C, thw), lambda n, k: (n, 0, k)),
                pl.BlockSpec((1, 1, thw), lambda n, k: (n, 0, k)),
            ],
            out_specs=pl.BlockSpec((1, 2, C), lambda n, k: (n, 0, 0)),
            scratch_shapes=[pltpu.VMEM((2, C), jnp.float32)],
        ),
        compiler_params=pltpu.CompilerParams(
            dimension_semantics=("parallel", "arbitrary")),
    )(x, t)

    return out[:, 0, :], out[:, 1, :]


def miou_loss(inputs_nchw, target_nhw, weight, n_classes, *, thw_target=8192):
    """Full mIoULoss forward: -mean(weights * inter / (weights * union + 1e-8))."""
    weights = (weight * weight).astype(jnp.float32)   # matches Variable(weight * weight)
    inter, union = miou_inter_union(inputs_nchw, target_nhw, n_classes,
                                    thw_target=thw_target)
    loss = weights * inter / (weights * union + 1e-8)
    return -jnp.mean(loss)


def _miou_loss_ref(inputs_nchw, target_nhw, weight, n_classes):
    """Pure-JAX reference for correctness checking."""
    N, C, H, W = inputs_nchw.shape
    weights = (weight * weight).astype(jnp.float32)
    sm = jax.nn.softmax(inputs_nchw.astype(jnp.float32), axis=1)
    onehot = jax.nn.one_hot(target_nhw, C, axis=1, dtype=jnp.float32)
    prod = sm * onehot
    inter = prod.reshape(N, C, -1).sum(-1)
    union = (sm + onehot - prod).reshape(N, C, -1).sum(-1)
    loss = weights * inter / (weights * union + 1e-8)
    return -jnp.mean(loss)


if __name__ == "__main__":
    key = jax.random.PRNGKey(0)

    # --- case 1: module default (n_classes=2), single HW tile -------------
    N, C, H, W = 2, 2, 16, 16
    k1, k2, k3 = jax.random.split(key, 3)
    inputs = jax.random.normal(k1, (N, C, H, W), dtype=jnp.float32)
    target = jax.random.randint(k2, (N, H, W), 0, C, dtype=jnp.int32)
    weight = jnp.arange(1, C + 1, dtype=jnp.float32)      # [1., 2.]

    out = jax.block_until_ready(miou_loss(inputs, target, weight, n_classes=C))
    ref = _miou_loss_ref(inputs, target, weight, n_classes=C)
    assert jnp.allclose(out, ref, atol=1e-5, rtol=1e-5), (out, ref)

    # --- case 2: multiple HW tiles + padded tail masking (small thw) ------
    N2, C2, H2, W2 = 2, 4, 20, 20                         # HW=400 -> 4 tiles of 128
    k4, k5 = jax.random.split(k3)
    inputs2 = jax.random.normal(k4, (N2, C2, H2, W2), dtype=jnp.float32)
    target2 = jax.random.randint(k5, (N2, H2, W2), 0, C2, dtype=jnp.int32)
    weight2 = jnp.arange(1, C2 + 1, dtype=jnp.float32)

    out2 = jax.block_until_ready(
        miou_loss(inputs2, target2, weight2, n_classes=C2, thw_target=128))
    ref2 = _miou_loss_ref(inputs2, target2, weight2, n_classes=C2)
    assert jnp.allclose(out2, ref2, atol=1e-5, rtol=1e-5), (out2, ref2)

    print("KERNEL_OK")
</pallas_src>

<mosaic_0001>
module attributes {stable_mosaic.version = 11 : i64} {
  func.func @_miou_kernel(%arg0: i32, %arg1: i32, %arg2: memref<1x2x256xf32, #tpu.memory_space<vmem>>, %arg3: memref<1x1x256xi32, #tpu.memory_space<vmem>>, %arg4: memref<1x2x2xf32, #tpu.memory_space<vmem>>, %arg5: memref<2x2xf32, #tpu.memory_space<vmem>>) attributes {dimension_semantics = [#tpu.dimension_semantics<parallel>, #tpu.dimension_semantics<arbitrary>], iteration_bounds = array<i64: 2, 1>, scalar_prefetch = 0 : i64, scratch_operands = 1 : i64, tpu.core_type = #tpu.core_type<tc>, window_params = [{transform_indices = @transform_0, window_bounds = array<i64: 1, 2, 256>}, {transform_indices = @transform_1, window_bounds = array<i64: 1, 1, 256>}, {transform_indices = @transform_2, window_bounds = array<i64: 1, 2, 2>}]} {
    %c0_i32 = arith.constant 0 : i32
    %0 = arith.cmpi eq, %arg1, %c0_i32 : i32
    %1 = arith.extui %0 : i1 to i32
    %c0_i32_0 = arith.constant 0 : i32
    %2 = arith.cmpi ne, %1, %c0_i32_0 : i32
    scf.if %2 {
      %cst_20 = arith.constant 0.000000e+00 : f32
      %40 = vector.broadcast %cst_20 : f32 to vector<2x2xf32>
      %c0_21 = arith.constant 0 : index
      %c0_22 = arith.constant 0 : index
      %41 = vector.load %arg5[%c0_21, %c0_22] : memref<2x2xf32, #tpu.memory_space<vmem>>, vector<2x2xf32>
      tpu.vector_store %arg5[%c0_21, %c0_22], %40 {strides = array<i32>} : memref<2x2xf32, #tpu.memory_space<vmem>>, vector<2x2xf32>,
    } else {
    }
    %c0 = arith.constant 0 : index
    %c0_1 = arith.constant 0 : index
    %c0_2 = arith.constant 0 : index
    %3 = vector.load %arg2[%c0, %c0_1, %c0_2] : memref<1x2x256xf32, #tpu.memory_space<vmem>>, vector<1x2x256xf32>
    %4 = vector.shape_cast %3 : vector<1x2x256xf32> to vector<2x256xf32>
    %c0_3 = arith.constant 0 : index
    %c0_4 = arith.constant 0 : index
    %c0_5 = arith.constant 0 : index
    %5 = vector.load %arg3[%c0_3, %c0_4, %c0_5] : memref<1x1x256xi32, #tpu.memory_space<vmem>>, vector<1x1x256xi32>
    %6 = vector.shape_cast %5 : vector<1x1x256xi32> to vector<1x256xi32>
    %cst = arith.constant dense<0xFF800000> : vector<256xf32>
    %7 = vector.multi_reduction <maximumf>, %4, %cst [0] : vector<2x256xf32> to vector<256xf32>
    %8 = vector.shape_cast %7 : vector<256xf32> to vector<1x256xf32>
    %9 = vector.broadcast %8 : vector<1x256xf32> to vector<2x256xf32>
    %10 = arith.subf %4, %9 : vector<2x256xf32>
    %11 = math.exp %10 : vector<2x256xf32>
    %cst_6 = arith.constant dense<0.000000e+00> : vector<256xf32>
    %12 = vector.multi_reduction <add>, %11, %cst_6 [0] : vector<2x256xf32> to vector<256xf32>
    %13 = vector.shape_cast %12 : vector<256xf32> to vector<1x256xf32>
    %14 = tpu.reciprocal %13 : vector<1x256xf32> -> vector<1x256xf32>
    %15 = vector.broadcast %14 : vector<1x256xf32> to vector<2x256xf32>
    %16 = arith.mulf %11, %15 : vector<2x256xf32>
    %17 = tpu.iota {dimensions = array<i32: 0>} : vector<2x256xi32>
    %18 = vector.broadcast %6 : vector<1x256xi32> to vector<2x256xi32>
    %19 = arith.cmpi eq, %17, %18 : vector<2x256xi32>
    %cst_7 = arith.constant 0.000000e+00 : f32
    %20 = vector.broadcast %cst_7 : f32 to vector<2x256xf32>
    %21 = arith.select %19, %16, %20 : vector<2x256xi1>, vector<2x256xf32>
    %cst_8 = arith.constant dense<0.000000e+00> : vector<2xf32>
    %22 = vector.multi_reduction <add>, %21, %cst_8 [1] : vector<2x256xf32> to vector<2xf32>
    %23 = arith.extui %19 : vector<2x256xi1> to vector<2x256xi32>
    %24 = arith.sitofp %23 : vector<2x256xi32> to vector<2x256xf32>
    %cst_9 = arith.constant dense<0.000000e+00> : vector<2xf32>
    %25 = vector.multi_reduction <add>, %24, %cst_9 [1] : vector<2x256xf32> to vector<2xf32>
    %cst_10 = arith.constant dense<0.000000e+00> : vector<2xf32>
    %26 = vector.multi_reduction <add>, %16, %cst_10 [1] : vector<2x256xf32> to vector<2xf32>
    %27 = arith.addf %26, %25 : vector<2xf32>
    %28 = arith.subf %27, %22 : vector<2xf32>
    %c0_11 = arith.constant 0 : index
    %c0_12 = arith.constant 0 : index
    %29 = vector.load %arg5[%c0_11, %c0_12] : memref<2x2xf32, #tpu.memory_space<vmem>>, vector<1x2xf32>
    %30 = vector.shape_cast %22 : vector<2xf32> to vector<1x2xf32>
    %31 = arith.addf %29, %30 : vector<1x2xf32>
    %c0_13 = arith.constant 0 : index
    %c0_14 = arith.constant 0 : index
    %32 = vector.load %arg5[%c0_13, %c0_14] : memref<2x2xf32, #tpu.memory_space<vmem>>, vector<1x2xf32>
    tpu.vector_store %arg5[%c0_13, %c0_14], %31 {strides = array<i32>} : memref<2x2xf32, #tpu.memory_space<vmem>>, vector<1x2xf32>,
    %c1 = arith.constant 1 : index
    %c0_15 = arith.constant 0 : index
    %33 = vector.load %arg5[%c1, %c0_15] : memref<2x2xf32, #tpu.memory_space<vmem>>, vector<1x2xf32>
    %34 = vector.shape_cast %28 : vector<2xf32> to vector<1x2xf32>
    %35 = arith.addf %33, %34 : vector<1x2xf32>
    %c1_16 = arith.constant 1 : index
    %c0_17 = arith.constant 0 : index
    %36 = vector.load %arg5[%c1_16, %c0_17] : memref<2x2xf32, #tpu.memory_space<vmem>>, vector<1x2xf32>
    tpu.vector_store %arg5[%c1_16, %c0_17], %35 {strides = array<i32>} : memref<2x2xf32, #tpu.memory_space<vmem>>, vector<1x2xf32>,
    %c0_i32_18 = arith.constant 0 : i32
    %37 = arith.cmpi eq, %arg1, %c0_i32_18 : i32
    %38 = arith.extui %37 : i1 to i32
    %c0_i32_19 = arith.constant 0 : i32
    %39 = arith.cmpi ne, %38, %c0_i32_19 : i32
    scf.if %39 {
      %c0_20 = arith.constant 0 : index
      %c0_21 = arith.constant 0 : index
      %40 = vector.load %arg5[%c0_20, %c0_21] : memref<2x2xf32, #tpu.memory_space<vmem>>, vector<2x2xf32>
      %41 = vector.shape_cast %40 : vector<2x2xf32> to vector<1x2x2xf32>
      %c0_22 = arith.constant 0 : index
      %c0_23 = arith.constant 0 : index
      %c0_24 = arith.constant 0 : index
      %42 = vector.load %arg4[%c0_22, %c0_23, %c0_24] : memref<1x2x2xf32, #tpu.memory_space<vmem>>, vector<1x2x2xf32>
      tpu.vector_store %arg4[%c0_22, %c0_23, %c0_24], %41 {strides = array<i32>} : memref<1x2x2xf32, #tpu.memory_space<vmem>>, vector<1x2x2xf32>,
    } else {
    }
    return
  }
  func.func @transform_0(%arg0: i32, %arg1: i32) -> (i32, i32, i32) {
    %c0_i32 = arith.constant 0 : i32
    %c0_i32_0 = arith.constant 0 : i32
    return %arg0, %c0_i32, %arg1 : i32, i32, i32
  }
  func.func @transform_1(%arg0: i32, %arg1: i32) -> (i32, i32, i32) {
    %c0_i32 = arith.constant 0 : i32
    %c0_i32_0 = arith.constant 0 : i32
    return %arg0, %c0_i32, %arg1 : i32, i32, i32
  }
  func.func @transform_2(%arg0: i32, %arg1: i32) -> (i32, i32, i32) {
    %c0_i32 = arith.constant 0 : i32
    %c0_i32_0 = arith.constant 0 : i32
    %c0_i32_1 = arith.constant 0 : i32
    return %arg0, %c0_i32, %c0_i32_0 : i32, i32, i32
  }
}

</mosaic_0001>

<llo_original>
// kernel: tpu_custom_call.1
$region0: #{tpu_custom_call.1}
  #allocation0 [shape = 'u32[]', space=smem, size = 0x4, offset = 0x4, fixed_abs, tag = 'smem constant byte address 0x4 - core index']
  #allocation1 [shape = 'u32[144,128]{1,0:T(1,128)}', space=vmem, size = 0x12000, scoped, tag = 'internal scratch']
  #allocation2 [shape = 'f32[2,2]{1,0:T(2,128)}', space=vmem, size = 0x400, scoped, tag = 'scratch operand']
  %s0 = inlined_call_operand.hbm [shape: f32[2,2,256], index: 0, kind: input, shape index: {}]
  %s1 = inlined_call_operand.hbm [shape: s32[2,1,256], index: 1, kind: input, shape index: {}]
  %s2 = inlined_call_operand.hbm [shape: f32[2,2,2], index: 2, kind: output, shape index: {}]
  %s3 = sld [smem:[#allocation0]]
  $region57: #{tpu_custom_call.1} parent=0
    _
  %s5 = ssub.s32 1, %s3
  %s6 = scalar_select 0, %s5, %s3
  $region1: #{tpu_custom_call.1} parent=0
    #allocation3 [shape = 'u8[4096]{0}', space=vmem, size = 0x1000, scoped, tag = 'input window, operand 0']
    #allocation4 [shape = 's32[2]{0}', space=sflag, size = 0x8, scoped, tag = 'scoped memory for tpu_custom_call.1']
    #allocation5 [shape = 's32[2]{0}', space=sflag, size = 0x8, scoped, tag = 'scoped memory for tpu_custom_call.1']
    #allocation6 [shape = 'u8[2048]{0}', space=vmem, size = 0x800, scoped, tag = 'input window, operand 1']
    #allocation7 [shape = 's32[2]{0}', space=sflag, size = 0x8, scoped, tag = 'scoped memory for tpu_custom_call.1']
    #allocation8 [shape = 'u8[2048]{0}', space=vmem, size = 0x800, scoped, tag = 'output window, operand 0']
    %7 = vsyncpa [#allocation4], 0
    %s8 = scalar_lea.sflag [#allocation4], 1
    %9 = vsyncpa %s8, 0
    %10 = vsyncpa [#allocation7], 0
    %s11 = scalar_lea.sflag [#allocation7], 1
    %12 = vsyncpa %s11, 0
    %13 = vsyncpa [#allocation5], 0
    %s14 = scalar_lea.sflag [#allocation5], 1
    %15 = vsyncpa %s14, 0
    loop: start=0, step=1, limit=4
    $region2: #{tpu_custom_call.1} parent=1 // loop_pre_header
      _
    $region3: #{tpu_custom_call.1} parent=1 // loop_header
      %s17 = sphi 0, %s21
      %p18 = scmp.ge.s32.totalorder %s17, 4
      %s24 = sphi 0, %s36
      %s25 = sphi 0, %s32
      %s26 = sphi 0, %s24
      %s27 = sphi 0, %s25
      %s28 = sphi 0, %s26
      %s29 = sphi 0, %s27
      %s41 = sphi 0, %s43
      %s44 = sphi 0, %s41
      %s45 = sphi 0, %s44
      %s61 = sphi 0, %s45
      %s69 = sphi 0, %s71
      %s72 = sphi 0, %s69
      %s73 = sphi 0, %s72
      %s89 = sphi 0, %s73
      %s95 = sphi 0, %s97
      %s98 = sphi 0, %s95
      %s99 = sphi 0, %s98
      %s115 = sphi 0, %s99
    $region4: #{tpu_custom_call.1} parent=1 // loop_header_branch
      %20 = sbr.rel (%p18) target = $region8
    $region5: #{tpu_custom_call.1} parent=1 // loop_body
      %s22 = ssub.s32 %s17, 1
      %s23 = ssub.s32 %s17, 2
      %s30 = sadd.s32 1, %s25
      %p31 = scmp.ge.s32.totalorder %s30, 1
      %s32 = scalar_select %p31, 0, %s30
      %s33 = sadd.s32 1, %s24
      %s34 = scalar_select %p31, %s33, %s24
      %p35 = scmp.ge.s32.totalorder %s34, 2
      %s36 = scalar_select %p35, 0, %s34
      %s37 = ssub.s32 %s24, %s36
      %s38 = ssub.s32 %s25, %s32
      %s39 = sor.u32 %s37, %s38
      %p40 = scmp.eq.s32.totalorder %s39, 0
      %s42 = sadd.s32 %s41, 1
      %s43 = scalar_select %p40, %s41, %s42
      %p46 = pneg %p40
      %p47 = scmp.eq.s32.totalorder %s17, 1
      %p48 = por %p46, %p47
      %p49 = scmp.ne.s32.totalorder %s41, %s44
      %p50 = scmp.eq.s32.totalorder %s17, 0
      %p51 = por %p49, %p50
      %p52 = scmp.ne.s32.totalorder %s41, %s44
      %p53 = scmp.eq.s32.totalorder %s22, 1
      %p54 = por %p52, %p53
      %p55 = scmp.ne.s32.totalorder %s44, %s45
      %p56 = scmp.eq.s32.totalorder %s22, 0
      %p57 = por %p55, %p56
      %p58 = scmp.ne.s32.totalorder %s44, %s45
      %p59 = scmp.eq.s32.totalorder %s23, 1
      %p60 = por %p58, %p59
      %p62 = scmp.ne.s32.totalorder %s45, %s61
      %p63 = scmp.eq.s32.totalorder %s23, 0
      %p64 = por %p62, %p63
      %s65 = ssub.s32 %s24, %s36
      %s66 = ssub.s32 %s25, %s32
      %s67 = sor.u32 %s65, %s66
      %p68 = scmp.eq.s32.totalorder %s67, 0
      %s70 = sadd.s32 %s69, 1
      %s71 = scalar_select %p68, %s69, %s70
      %p74 = pneg %p68
      %p75 = scmp.eq.s32.totalorder %s17, 1
      %p76 = por %p74, %p75
      %p77 = scmp.ne.s32.totalorder %s69, %s72
      %p78 = scmp.eq.s32.totalorder %s17, 0
      %p79 = por %p77, %p78
      %p80 = scmp.ne.s32.totalorder %s69, %s72
      %p81 = scmp.eq.s32.totalorder %s22, 1
      %p82 = por %p80, %p81
      %p83 = scmp.ne.s32.totalorder %s72, %s73
      %p84 = scmp.eq.s32.totalorder %s22, 0
      %p85 = por %p83, %p84
      %p86 = scmp.ne.s32.totalorder %s72, %s73
      %p87 = scmp.eq.s32.totalorder %s23, 1
      %p88 = por %p86, %p87
      %p90 = scmp.ne.s32.totalorder %s73, %s89
      %p91 = scmp.eq.s32.totalorder %s23, 0
      %p92 = por %p90, %p91
      %s93 = ssub.s32 %s24, %s36
      %p94 = scmp.eq.s32.totalorder %s93, 0
      %s96 = sadd.s32 %s95, 1
      %s97 = scalar_select %p94, %s95, %s96
      %p100 = pneg %p94
      %p101 = scmp.eq.s32.totalorder %s17, 1
      %p102 = por %p100, %p101
      %p103 = scmp.ne.s32.totalorder %s95, %s98
      %p104 = scmp.eq.s32.totalorder %s17, 0
      %p105 = por %p103, %p104
      %p106 = scmp.ne.s32.totalorder %s95, %s98
      %p107 = scmp.eq.s32.totalorder %s22, 1
      %p108 = por %p106, %p107
      %p109 = scmp.ne.s32.totalorder %s98, %s99
      %p110 = scmp.eq.s32.totalorder %s22, 0
      %p111 = por %p109, %p110
      %p112 = scmp.ne.s32.totalorder %s98, %s99
      %p113 = scmp.eq.s32.totalorder %s23, 1
      %p114 = por %p112, %p113
      %p116 = scmp.ne.s32.totalorder %s99, %s115
      %p117 = scmp.eq.s32.totalorder %s23, 0
      %p118 = por %p116, %p117
      %p119 = scmp.le.s32.totalorder 1, %s17
      %p120 = scmp.lt.s32.totalorder %s17, 3
      %p121 = pnand %p119, %p120
      %p122 = pneg %p121
      // Predicated region
      $region9: #{tpu_custom_call.1} parent=5 // pred_check
        _
      $region10: #{tpu_custom_call.1} parent=5 // pred_check_branch
        %124 = sbr.rel (%p121) target = $region12
      $region11: #{tpu_custom_call.1} parent=5 // pred_region
        %s125 = ssub.s32 %s17, 1
      $region12: #{tpu_custom_call.1} parent=5 // pred_fallthru
        _
      %p126 = scmp.lt.s32.totalorder %s17, 2
      // Predicated region
      $region13: #{tpu_custom_call.1} parent=5 // pred_check
        %p127 = pneg %p126
      $region14: #{tpu_custom_call.1} parent=5 // pred_check_branch
        %129 = sbr.rel (%p127) target = $region16
      $region15: #{tpu_custom_call.1} parent=5 // pred_region
        // Predicated region
        $region17: #{tpu_custom_call.1} parent=15 // pred_check
          %p130 = pneg %p51
        $region18: #{tpu_custom_call.1} parent=15 // pred_check_branch
          %132 = sbr.rel (%p130) target = $region20
        $region19: #{tpu_custom_call.1} parent=15 // pred_region
          %s133 = sand.u32 %s41, 1
          %s134 = scalar_lea.sflag [#allocation4], %s133
          %s135 = sand.u32 %s41, 1
          %s136 = smul.addr %s135, 4
          %s137 = scalar_lea.vmem [#allocation3], %s136
          %s138 = smul.u32 2, %s25
          %s140 = ssub.s32 64, 64
          %141 = vsyncadd %s134, %s140
          %s142 = smul.addr %s24, 2
          %s143 = sadd.s32 %s138, %s142
          %s144 = smul.addr %s143, 32
          %s145 = scalar_lea.hbm %s0, %s144
          %s147 = sshll.u32 %s137, 4
          %s148 = int_to_ptr.vmem [resolvable:$true] %s147
          %150 = dma.hbm_to_vmem [thread:$0]  %s145, 64, %s148, %s134
        $region20: #{tpu_custom_call.1} parent=15 // pred_fallthru
          _
        // Predicated region
        $region21: #{tpu_custom_call.1} parent=15 // pred_check
          %p151 = pneg %p79
        $region22: #{tpu_custom_call.1} parent=15 // pred_check_branch
          %153 = sbr.rel (%p151) target = $region24
        $region23: #{tpu_custom_call.1} parent=15 // pred_region
          %s154 = sand.u32 %s69, 1
          %s155 = scalar_lea.sflag [#allocation7], %s154
          %s156 = sand.u32 %s69, 1
          %s157 = smul.addr %s156, 2
          %s158 = scalar_lea.vmem [#allocation6], %s157
          %s159 = smul.u32 2, %s25
          %s161 = ssub.s32 32, 32
          %162 = vsyncadd %s155, %s161
          %s163 = smul.addr %s24, 2
          %s164 = sadd.s32 %s159, %s163
          %s165 = smul.addr %s164, 16
          %s166 = scalar_lea.hbm %s1, %s165
          %s168 = sshll.u32 %s158, 4
          %s169 = int_to_ptr.vmem [resolvable:$true] %s168
          %171 = dma.hbm_to_vmem [thread:$0]  %s166, 32, %s169, %s155
        $region24: #{tpu_custom_call.1} parent=15 // pred_fallthru
          _
      $region16: #{tpu_custom_call.1} parent=5 // pred_fallthru
        _
      %p172 = scmp.le.s32.totalorder 1, %s17
      %p173 = scmp.lt.s32.totalorder %s17, 3
      %p174 = pnand %p172, %p173
      %p175 = pneg %p174
      // Predicated region
      $region25: #{tpu_custom_call.1} parent=5 // pred_check
        _
      $region26: #{tpu_custom_call.1} parent=5 // pred_check_branch
        %177 = sbr.rel (%p174) target = $region28
      $region27: #{tpu_custom_call.1} parent=5 // pred_region
        %s178 = ssub.s32 %s17, 1
        %s179 = sand.u32 %s44, 1
        %s180 = scalar_lea.sflag [#allocation4], %s179
        %s181 = sand.u32 %s44, 1
        %s182 = smul.addr %s181, 4
        %s183 = scalar_lea.vmem [#allocation3], %s182
        // Predicated region
        $region29: #{tpu_custom_call.1} parent=27 // pred_check
          %p184 = pneg %p57
        $region30: #{tpu_custom_call.1} parent=27 // pred_check_branch
          %186 = sbr.rel (%p184) target = $region32
        $region31: #{tpu_custom_call.1} parent=27 // pred_region
          %187 = dma.done %s180, 64
        $region32: #{tpu_custom_call.1} parent=27 // pred_fallthru
          _
        %s188 = sand.u32 %s72, 1
        %s189 = scalar_lea.sflag [#allocation7], %s188
        %s190 = sand.u32 %s72, 1
        %s191 = smul.addr %s190, 2
        %s192 = scalar_lea.vmem [#allocation6], %s191
        // Predicated region
        $region33: #{tpu_custom_call.1} parent=27 // pred_check
          %p193 = pneg %p85
        $region34: #{tpu_custom_call.1} parent=27 // pred_check_branch
          %195 = sbr.rel (%p193) target = $region36
        $region35: #{tpu_custom_call.1} parent=27 // pred_region
          %196 = dma.done %s189, 32
        $region36: #{tpu_custom_call.1} parent=27 // pred_fallthru
          _
        %s197 = sand.u32 %s44, 1
        %s198 = scalar_lea.sflag [#allocation4], %s197
        %s199 = sand.u32 %s44, 1
        %s200 = smul.addr %s199, 4
        %s201 = scalar_lea.vmem [#allocation3], %s200
        %p202 = pneg %p57
        %p203 = pneg %p54
        %s204 = sand.u32 %s72, 1
        %s205 = scalar_lea.sflag [#allocation7], %s204
        %s206 = sand.u32 %s72, 1
        %s207 = smul.addr %s206, 2
        %s208 = scalar_lea.vmem [#allocation6], %s207
        %p209 = pneg %p85
        %p210 = pneg %p82
        %p211 = pneg %p111
        %p212 = pneg %p108
        %s213 = sand.u32 %s98, 1
        %s214 = scalar_lea.sflag [#allocation5], %s213
        %s215 = sand.u32 %s98, 1
        %s216 = smul.addr %s215, 2
        %s217 = scalar_lea.vmem [#allocation8], %s216
        %s218 = smul.u32 2, %s27
        %s219 = smul.u32 2, %s27
        %p220 = scmp.eq.s32.totalorder %s27, 0
        // Predicated region
        $region37: #{tpu_custom_call.1} parent=27 // pred_check
          %p221 = pneg %p220
        $region38: #{tpu_custom_call.1} parent=27 // pred_check_branch
          %223 = sbr.rel (%p221) target = $region40
        $region39: #{tpu_custom_call.1} parent=27 // pred_region
          %vm224 = vcmask 9216
          %225 = vst.msk [vmem:[#allocation2] sm:$0x3] %vm224, 0.0
        $region40: #{tpu_custom_call.1} parent=27 // pred_fallthru
          _
        %v226 = vld [vmem:[%s183] sm:$0xf]
        %v227 = vld [vmem:[%s192] sm:$0x3]
        %v230 = vunpack.c.l.s4 1983009808
        %v231 = vunpack.c.0.s8 %v230
        %v232 = vlaneseq
        %v233 = vshrl.u32 %v232, 7
        %v234 = vsub.s32 %v231, %v233
        %v235 = vrot.slane %v226, %v234
        %v236 = vcombine.high %v235, %v235
        %vm239 = vcmask 1041408
        %v240 = vsel %vm239, %v235, -inf
        %v241 = vrot.slane %v240, 4
        %v242 = vmax.f32 %v240, %v241
        %v243 = vrot.slane %v242, 2
        %v244 = vmax.f32 %v242, %v243
        %v245 = vrot.slane %v244, 1
        %v246 = vmax.f32 %v244, %v245
        %v247 = vsel %vm239, %v236, -inf
        %v248 = vrot.slane %v247, 4
        %v249 = vmax.f32 %v247, %v248
        %v250 = vrot.slane %v249, 2
        %v251 = vmax.f32 %v249, %v250
        %v252 = vrot.slane %v251, 1
        %v253 = vmax.f32 %v251, %v252
        %v256 = vcombine.low %v246, %v253
        %v258 = vunpack.c.l.s4 1983009808
        %v259 = vunpack.c.0.s8 %v258
        %v260 = vlaneseq
        %v261 = vshrl.u32 %v260, 7
        %v262 = vsub.s32 %v259, %v261
        %v263 = vrot.slane %v256, %v262
        %v265 = vsub.f32 %v226, %v263
        %v266 = vmul.f32 %v265, 1.442695
        %v267 = vpow.pop %v266
        %v270 = vunpack.c.l.s4 1983009808
        %v271 = vunpack.c.0.s8 %v270
        %v272 = vlaneseq
        %v273 = vshrl.u32 %v272, 7
        %v274 = vsub.s32 %v271, %v273
        %v275 = vrot.slane %v267, %v274
        %v276 = vcombine.high %v275, %v275
        %v279 = vsel %vm239, %v275, 0.0
        %v280 = vrot.slane %v279, 4
        %v281 = vadd.f32 %v279, %v280
        %v282 = vrot.slane %v281, 2
        %v283 = vadd.f32 %v281, %v282
        %v284 = vrot.slane %v283, 1
        %v285 = vadd.f32 %v283, %v284
        %v286 = vsel %vm239, %v276, 0.0
        %v287 = vrot.slane %v286, 4
        %v288 = vadd.f32 %v286, %v287
        %v289 = vrot.slane %v288, 2
        %v290 = vadd.f32 %v288, %v289
        %v291 = vrot.slane %v290, 1
        %v292 = vadd.f32 %v290, %v291
        %v293 = vrcp.pop %v285
        %v294 = vrcp.pop %v292
        %v297 = vcombine.low %v293, %v294
        %v299 = vunpack.c.l.s4 1983009808
        %v300 = vunpack.c.0.s8 %v299
        %v301 = vlaneseq
        %v302 = vshrl.u32 %v301, 7
        %v303 = vsub.s32 %v300, %v302
        %v304 = vrot.slane %v297, %v303
        %v306 = vmul.f32 %v267, %v304
        %v307 = vlaneseq
        %v308 = vshrl.u32 %v307, 7
        %v309 = vlaneseq
        %v310 = vshrl.u32 %v309, 7
        %v311 = vsub.s32 0, %v310
        %v312 = vrot.slane %v227, %v311
        %v313 = vlaneseq
        %v314 = vshrl.u32 %v313, 7
        %v315 = vsub.s32 1, %v314
        %v316 = vrot.slane %v227, %v315
        %vm317 = vcmp.eq.s32.totalorder %v308, %v312
        %vm318 = vcmp.eq.s32.totalorder %v308, %v316
        %v321 = vunpack.c.l.s4 1983009808
        %v322 = vunpack.c.0.s8 %v321
        %v323 = vlaneseq
        %v324 = vshrl.u32 %v323, 7
        %v325 = vsub.s32 %v322, %v324
        %v326 = vrot.slane %v306, %v325
        %v327 = vcombine.high %v326, %v326
        %v330 = vsel %vm317, %v326, 0.0
        %v331 = vsel %vm318, %v327, 0.0
        %v332 = vsel %vm239, %v330, 0.0
        %v333 = vsel %vm239, %v331, 0.0
        %v334 = vadd.f32 %v332, %v333
        %335 = vadd.xlane.f32.xlu0 %v334
        %v336 = vpop.xlane.xlu0 %335
        %v337 = vsel %vm317, 1, 0
        %v338 = vsel %vm318, 1, 0
        %v339 = vcvt.s32.f32 %v337
        %v340 = vcvt.s32.f32 %v338
        %v341 = vsel %vm239, %v339, 0.0
        %v342 = vsel %vm239, %v340, 0.0
        %v343 = vadd.f32 %v341, %v342
        %344 = vadd.xlane.f32.xlu0 %v343
        %v345 = vpop.xlane.xlu0 %344
        %v346 = vsel %vm239, %v326, 0.0
        %v347 = vsel %vm239, %v327, 0.0
        %v348 = vadd.f32 %v346, %v347
        %349 = vadd.xlane.f32.xlu0 %v348
        %v350 = vpop.xlane.xlu0 %349
        %v351 = vadd.f32 %v350, %v345
        %v352 = vsub.f32 %v351, %v336
        %v353 = vld [vmem:[#allocation2] sm:$0x1]
        %v355 = vlaneseq
        %v356 = vand.u32 %v355, 127
        %v357 = vlaneseq
        %v358 = vshrl.u32 %v357, 7
        %v359 = vsub.s32 %v356, %v358
        %v360 = vrot.slane %v336, %v359
        %v362 = vadd.f32 %v353, %v360
        %vm363 = vcmask 8192
        %364 = vst.msk [vmem:[#allocation2] sm:$0x1] %vm363, %v362
        %v365 = vld [vmem:[#allocation2 + $0x1] sm:$0x1]
        %v367 = vlaneseq
        %v368 = vshrl.u32 %v367, 7
        %v369 = vsub.s32 %v356, %v368
        %v370 = vrot.slane %v352, %v369
        %v372 = vadd.f32 %v365, %v370
        %373 = vst.msk [vmem:[#allocation2 + $0x1] sm:$0x1] %vm363, %v372
        // Predicated region
        $region41: #{tpu_custom_call.1} parent=27 // pred_check
          %p374 = pneg %p220
        $region42: #{tpu_custom_call.1} parent=27 // pred_check_branch
          %376 = sbr.rel (%p374) target = $region44
        $region43: #{tpu_custom_call.1} parent=27 // pred_region
          %v377 = vld [vmem:[#allocation2] sm:$0x3]
          %vm378 = vcmask 9216
          %379 = vst.msk [vmem:[%s217] sm:$0x3] %vm378, %v377
        $region44: #{tpu_custom_call.1} parent=27 // pred_fallthru
          _
        %s380 = sand.u32 %s98, 1
        %s381 = scalar_lea.sflag [#allocation5], %s380
        %s382 = sand.u32 %s98, 1
        %s383 = smul.addr %s382, 2
        %s384 = scalar_lea.vmem [#allocation8], %s383
        // Predicated region
        $region45: #{tpu_custom_call.1} parent=27 // pred_check
          %p385 = pneg %p108
        $region46: #{tpu_custom_call.1} parent=27 // pred_check_branch
          %387 = sbr.rel (%p385) target = $region48
        $region47: #{tpu_custom_call.1} parent=27 // pred_region
          %s389 = ssub.s32 32, 32
          %390 = vsyncadd %s381, %s389
          %s391 = smul.addr %s26, 32
          %s392 = scalar_lea.hbm %s2, %s391
          %s394 = sshll.u32 %s384, 4
          %s395 = int_to_ptr.vmem [resolvable:$true] %s394
          %397 = dma.vmem_to_hbm [thread:$0]  %s395, 32, %s392, %s381
        $region48: #{tpu_custom_call.1} parent=27 // pred_fallthru
          _
      $region28: #{tpu_custom_call.1} parent=5 // pred_fallthru
        _
      %p398 = scmp.le.s32.totalorder 2, %s17
      // Predicated region
      $region49: #{tpu_custom_call.1} parent=5 // pred_check
        %p399 = pneg %p398
      $region50: #{tpu_custom_call.1} parent=5 // pred_check_branch
        %401 = sbr.rel (%p399) target = $region52
      $region51: #{tpu_custom_call.1} parent=5 // pred_region
        %s402 = ssub.s32 %s17, 2
        // Predicated region
        $region53: #{tpu_custom_call.1} parent=51 // pred_check
          %p403 = pneg %p114
        $region54: #{tpu_custom_call.1} parent=51 // pred_check_branch
          %405 = sbr.rel (%p403) target = $region56
        $region55: #{tpu_custom_call.1} parent=51 // pred_region
          %s406 = sand.u32 %s99, 1
          %s407 = scalar_lea.sflag [#allocation5], %s406
          %s408 = sand.u32 %s99, 1
          %s409 = smul.addr %s408, 2
          %s410 = scalar_lea.vmem [#allocation8], %s409
          %411 = dma.done %s407, 32
        $region56: #{tpu_custom_call.1} parent=51 // pred_fallthru
          _
      $region52: #{tpu_custom_call.1} parent=5 // pred_fallthru
        _
    $region6: #{tpu_custom_call.1} parent=1 // loop_footer
      %s21 = sadd.s32 1, %s17
    $region7: #{tpu_custom_call.1} parent=1 // loop_footer_branch
      %16 = sbr.rel target = $region3
    $region8: #{tpu_custom_call.1} parent=1 // loop_exit
      _
    %412 = vsyncpa [#allocation4], 1
    %s413 = scalar_lea.sflag [#allocation4], 1
    %414 = vsyncpa %s413, 1
    %415 = vsyncpa [#allocation7], 1
    %s416 = scalar_lea.sflag [#allocation7], 1
    %417 = vsyncpa %s416, 1
    %418 = vsyncpa [#allocation5], 1
    %s419 = scalar_lea.sflag [#allocation5], 1
    %420 = vsyncpa %s419, 1

</llo_original>
